<compile_context>
chip_gen: v7x
topology: tpu7x:2x2x1
jax: 0.10.0
libtpu: 0.0.40
codegen_flags: <defaults>
</compile_context>

<pallas_src>
import math
import functools

import jax
import jax.numpy as jnp
from jax.experimental import pallas as pl
from jax.experimental.pallas import tpu as pltpu


HIDDEN = 1024  # `ch` in the PyTorch module
_INV_SQRT2 = 1.0 / math.sqrt(2.0)
_SQRT_2_OVER_PI = math.sqrt(2.0 / math.pi)


def _round_up(n, m):
    return ((n + m - 1) // m) * m


def _is_v5():
    try:
        kind = jax.devices()[0].device_kind.lower()
    except Exception:
        return False
    return "v5" in kind


def _default_dtypes():
    """(matmul_dtype, gelu_dtype) defaults per TPU generation.

    v5e: VPU has no bf16 -> GELU in f32; its f32 MXU is slow -> bf16 matmuls.
    v6e/v7x: kernel is GELU-bound -> f32 first-matmul operands are free
    accuracy; bf16 GELU doubles VALU throughput on the bottleneck phase.
    """
    if _is_v5():
        return jnp.bfloat16, jnp.float32
    return jnp.float32, jnp.bfloat16


# --------------------------------------------------------------------------
# Kernel
# --------------------------------------------------------------------------
def _pose_regressor_kernel(x_ref, wh_ref, bh_ref, wo_ref, bo_ref, o_ref, *,
                           gelu_dtype, approximate):
    """Fused MLP for one batch tile: (x @ Wh + bh) -> gelu -> (@ Wo + bo)."""
    # fc_h : MXU matmul with f32 accumulation; bias add in f32.
    h = jnp.dot(x_ref[...], wh_ref[...], preferred_element_type=jnp.float32)
    h = h + bh_ref[...]                      # (1, H) broadcasts over the tile

    # GELU — the dominant cost at these shapes.  Computed in `gelu_dtype`
    # (bf16 on v6e/v7x for packed-VALU throughput, f32 on v5e).
    h = h.astype(gelu_dtype)
    if approximate:
        # tanh-approx GELU: the tanh runs on the otherwise-idle EUP slot.
        inner = gelu_dtype(_SQRT_2_OVER_PI) * (h + gelu_dtype(0.044715) * h * h * h)
        h = 0.5 * h * (1.0 + jnp.tanh(inner))
    else:
        # exact erf GELU == torch.nn.functional.gelu default.
        h = 0.5 * h * (1.0 + jax.lax.erf(h * gelu_dtype(_INV_SQRT2)))

    # fc_o : second matmul, f32 accumulation.
    out = jnp.dot(h.astype(wo_ref.dtype), wo_ref[...],
                  preferred_element_type=jnp.float32)
    out = out + bo_ref[...]                  # (1, O_pad) broadcasts
    o_ref[...] = out.astype(o_ref.dtype)


# --------------------------------------------------------------------------
# Forward wrapper
# --------------------------------------------------------------------------
@functools.partial(
    jax.jit,
    static_argnames=("output_dim", "tile_b", "approximate_gelu",
                     "matmul_dtype", "gelu_dtype"))
def _pose_regressor_impl(x, w_h, b_h, w_o, b_o, *, output_dim, tile_b,
                         approximate_gelu, matmul_dtype, gelu_dtype):
    B, D = x.shape
    H = w_h.shape[1]
    O_pad = w_o.shape[1]          # already padded to a multiple of 128
    out_dtype = x.dtype

    # --- batch tiling -------------------------------------------------------
    # 16-row granule keeps bf16 tiles fully sublane-packed (fine for f32 too).
    granule = 16
    if B <= tile_b:
        # Give v7x's two TensorCores separate grid steps for mid-size batches.
        n_tiles = 2 if B >= 64 else 1
        tb = _round_up(pl.cdiv(B, n_tiles), granule)
    else:
        tb = _round_up(tile_b, granule)
    B_pad = _round_up(B, tb)

    x_p = x if B_pad == B else jnp.pad(x, ((0, B_pad - B), (0, 0)))
    x_p = x_p.astype(matmul_dtype)

    grid = (B_pad // tb,)

    bytes_accessed = (
        B_pad * D * x_p.dtype.itemsize
        + w_h.size * w_h.dtype.itemsize
        + w_o.size * w_o.dtype.itemsize
        + b_h.size * b_h.dtype.itemsize
        + b_o.size * b_o.dtype.itemsize
        + B_pad * O_pad * jnp.dtype(out_dtype).itemsize)

    kernel = functools.partial(_pose_regressor_kernel,
                               gelu_dtype=gelu_dtype,
                               approximate=approximate_gelu)

    out_padded = pl.pallas_call(
        kernel,
        out_shape=jax.ShapeDtypeStruct((B_pad, O_pad), out_dtype),
        grid_spec=pltpu.PrefetchScalarGridSpec(
            num_scalar_prefetch=0,
            grid=grid,
            in_specs=[
                # batch tile of activations
                pl.BlockSpec((tb, D), lambda i: (i, 0)),
                # weights / biases: full arrays, same block every grid step
                # (stay resident in VMEM across the grid).
                pl.BlockSpec((D, H), lambda i: (0, 0)),
                pl.BlockSpec((1, H), lambda i: (0, 0)),
                pl.BlockSpec((H, O_pad), lambda i: (0, 0)),
                pl.BlockSpec((1, O_pad), lambda i: (0, 0)),
            ],
            out_specs=pl.BlockSpec((tb, O_pad), lambda i: (i, 0)),
        ),
        compiler_params=pltpu.CompilerParams(
            dimension_semantics=("parallel",),
        ),
        cost_estimate=pl.CostEstimate(
            flops=2 * B_pad * (D * H + H * O_pad),
            transcendentals=B_pad * H,           # one erf/tanh per hidden elem
            bytes_accessed=bytes_accessed,
        ),
    )(x_p, w_h, b_h, w_o, b_o)

    # Slice batch / output padding off (cheap in XLA).
    return out_padded[:B, :output_dim]


def pose_regressor(x, params, *, tile_b=512, approximate_gelu=False):
    """x: [B, decoder_dim]; params: dict from prepare_pose_regressor_params."""
    return _pose_regressor_impl(
        x, params["w_h"], params["b_h"], params["w_o"], params["b_o"],
        output_dim=params["output_dim"], tile_b=tile_b,
        approximate_gelu=approximate_gelu,
        matmul_dtype=params["matmul_dtype"], gelu_dtype=params["gelu_dtype"])


# --------------------------------------------------------------------------
# One-time parameter packing (cast / pad outside the per-call forward)
# --------------------------------------------------------------------------
def prepare_pose_regressor_params(w_h, b_h, w_o, b_o, *, matmul_dtype=None,
                                  gelu_dtype=None):
    """Pre-cast and pre-pad parameters once.

    w_h: [D, 1024], b_h: [1, 1024], w_o: [1024, O], b_o: [1, O]
    """
    d_mm, d_gelu = _default_dtypes()
    matmul_dtype = matmul_dtype if matmul_dtype is not None else d_mm
    gelu_dtype = gelu_dtype if gelu_dtype is not None else d_gelu

    O = w_o.shape[1]
    O_pad = _round_up(max(O, 1), 128)        # lane-dense unmasked writeback

    # Second matmul runs in the narrower of (matmul_dtype, gelu_dtype): its
    # LHS is the GELU output, so no extra precision is lost.
    wo_dtype = matmul_dtype
    if jnp.dtype(gelu_dtype).itemsize < jnp.dtype(matmul_dtype).itemsize:
        wo_dtype = gelu_dtype

    w_o_p = jnp.pad(w_o, ((0, 0), (0, O_pad - O))) if O_pad != O else w_o
    b_o_p = jnp.pad(b_o, ((0, 0), (0, O_pad - O))) if O_pad != O else b_o

    return dict(
        w_h=jnp.asarray(w_h, matmul_dtype),
        b_h=jnp.asarray(b_h, jnp.float32),
        w_o=jnp.asarray(w_o_p, wo_dtype),
        b_o=jnp.asarray(b_o_p, jnp.float32),
        output_dim=O,
        matmul_dtype=matmul_dtype,
        gelu_dtype=gelu_dtype,
    )


# --------------------------------------------------------------------------
# Init (matches the PyTorch module) + pure-JAX reference
# --------------------------------------------------------------------------
def _xavier_uniform(key, shape_out_in):
    """torch.nn.init.xavier_uniform_ for a Linear weight of shape (out, in)."""
    fan_out, fan_in = shape_out_in
    limit = math.sqrt(6.0 / (fan_in + fan_out))
    return jax.random.uniform(
        key, shape_out_in, dtype=jnp.float32, minval=-limit, maxval=limit)


def init_pose_regressor_params(key, decoder_dim, output_dim):
    """Deterministic synthetic params matching the PyTorch module's shapes."""
    k_wh, k_wo, k_bh, k_bo = jax.random.split(key, 4)
    wh_oi = _xavier_uniform(k_wh, (HIDDEN, decoder_dim))
    wo_oi = _xavier_uniform(k_wo, (output_dim, HIDDEN))
    bh = jax.random.uniform(
        k_bh, (1, HIDDEN), dtype=jnp.float32,
        minval=-1.0 / math.sqrt(decoder_dim), maxval=1.0 / math.sqrt(decoder_dim))
    bo = jax.random.uniform(
        k_bo, (1, output_dim), dtype=jnp.float32,
        minval=-1.0 / math.sqrt(HIDDEN), maxval=1.0 / math.sqrt(HIDDEN))
    # Pre-transpose weights to [in, out] for the x @ W kernel layout.
    return wh_oi.T, bh, wo_oi.T, bo


def pose_regressor_reference(x, w_h, b_h, w_o, b_o):
    """Pure-JAX f32 reference (exact erf GELU) for correctness checking."""
    h = x @ w_h + b_h
    h = 0.5 * h * (1.0 + jax.lax.erf(h / jnp.sqrt(2.0)))
    return h @ w_o + b_o


if __name__ == "__main__":
    key = jax.random.PRNGKey(0)
    k_params, k_x = jax.random.split(key)

    batch = 16        # e.g. number of query tokens / poses
    decoder_dim = 32  # small decoder width
    output_dim = 7    # typical pose vector (3 trans + 4 quat)

    w_h, b_h, w_o, b_o = init_pose_regressor_params(k_params, decoder_dim, output_dim)
    params = prepare_pose_regressor_params(w_h, b_h, w_o, b_o)

    x = jax.random.normal(k_x, (batch, decoder_dim), dtype=jnp.float32)

    out = pose_regressor(x, params)
    out = jax.block_until_ready(out)

    ref = pose_regressor_reference(x, w_h, b_h, w_o, b_o)
    assert out.shape == (batch, output_dim), out.shape
    # bf16 GELU / bf16 second-matmul operands -> tolerant comparison vs f32 ref.
    assert jnp.allclose(out, ref, atol=3e-2, rtol=3e-2), "mismatch vs reference"

    print("KERNEL_OK")
</pallas_src>

<mosaic_0001>
module attributes {stable_mosaic.version = 11 : i64} {
  func.func @_pose_regressor_kernel(%arg0: i32, %arg1: memref<16x32xf32, #tpu.memory_space<vmem>>, %arg2: memref<32x1024xf32, #tpu.memory_space<vmem>>, %arg3: memref<1x1024xf32, #tpu.memory_space<vmem>>, %arg4: memref<1024x128xbf16, #tpu.memory_space<vmem>>, %arg5: memref<1x128xf32, #tpu.memory_space<vmem>>, %arg6: memref<16x128xf32, #tpu.memory_space<vmem>>) attributes {dimension_semantics = [#tpu.dimension_semantics<parallel>], iteration_bounds = array<i64: 1>, scalar_prefetch = 0 : i64, scratch_operands = 0 : i64, tpu.core_type = #tpu.core_type<tc>, window_params = [{transform_indices = @transform_0, window_bounds = array<i64: 16, 32>}, {pipeline_mode = #tpu.pipeline_mode<synchronous>, transform_indices = @transform_1, window_bounds = array<i64: 32, 1024>}, {pipeline_mode = #tpu.pipeline_mode<synchronous>, transform_indices = @transform_2, window_bounds = array<i64: 1, 1024>}, {pipeline_mode = #tpu.pipeline_mode<synchronous>, transform_indices = @transform_3, window_bounds = array<i64: 1024, 128>}, {pipeline_mode = #tpu.pipeline_mode<synchronous>, transform_indices = @transform_4, window_bounds = array<i64: 1, 128>}, {transform_indices = @transform_5, window_bounds = array<i64: 16, 128>}]} {
    %c0 = arith.constant 0 : index
    %c0_0 = arith.constant 0 : index
    %0 = vector.load %arg1[%c0, %c0_0] : memref<16x32xf32, #tpu.memory_space<vmem>>, vector<16x32xf32>
    %c0_1 = arith.constant 0 : index
    %c0_2 = arith.constant 0 : index
    %1 = vector.load %arg2[%c0_1, %c0_2] : memref<32x1024xf32, #tpu.memory_space<vmem>>, vector<32x1024xf32>
    %cst = arith.constant dense<0.000000e+00> : vector<16x1024xf32>
    %2 = tpu.matmul %0, %1, %cst {dimension_numbers = #tpu.dot_dimension_numbers<[1], [0], [0], [1], [0, 0, 1, 1], [], []>} : vector<16x32xf32>, vector<32x1024xf32>, vector<16x1024xf32> -> vector<16x1024xf32>
    %c0_3 = arith.constant 0 : index
    %c0_4 = arith.constant 0 : index
    %3 = vector.load %arg3[%c0_3, %c0_4] : memref<1x1024xf32, #tpu.memory_space<vmem>>, vector<1x1024xf32>
    %4 = vector.broadcast %3 : vector<1x1024xf32> to vector<16x1024xf32>
    %5 = arith.addf %2, %4 : vector<16x1024xf32>
    %6 = arith.truncf %5 : vector<16x1024xf32> to vector<16x1024xbf16>
    %cst_5 = arith.constant 5.000000e-01 : bf16
    %7 = vector.broadcast %cst_5 : bf16 to vector<16x1024xbf16>
    %8 = arith.mulf %7, %6 : vector<16x1024xbf16>
    %cst_6 = arith.constant 7.070310e-01 : bf16
    %9 = vector.broadcast %cst_6 : bf16 to vector<16x1024xbf16>
    %10 = arith.mulf %6, %9 : vector<16x1024xbf16>
    %11 = math.erf %10 : vector<16x1024xbf16>
    %cst_7 = arith.constant 1.000000e+00 : bf16
    %12 = vector.broadcast %cst_7 : bf16 to vector<16x1024xbf16>
    %13 = arith.addf %12, %11 : vector<16x1024xbf16>
    %14 = arith.mulf %8, %13 : vector<16x1024xbf16>
    %c0_8 = arith.constant 0 : index
    %c0_9 = arith.constant 0 : index
    %15 = vector.load %arg4[%c0_8, %c0_9] : memref<1024x128xbf16, #tpu.memory_space<vmem>>, vector<1024x128xbf16>
    %cst_10 = arith.constant dense<0.000000e+00> : vector<16x128xf32>
    %16 = tpu.matmul %14, %15, %cst_10 {dimension_numbers = #tpu.dot_dimension_numbers<[1], [0], [0], [1], [0, 0, 1, 1], [], []>} : vector<16x1024xbf16>, vector<1024x128xbf16>, vector<16x128xf32> -> vector<16x128xf32>
    %c0_11 = arith.constant 0 : index
    %c0_12 = arith.constant 0 : index
    %17 = vector.load %arg5[%c0_11, %c0_12] : memref<1x128xf32, #tpu.memory_space<vmem>>, vector<1x128xf32>
    %18 = vector.broadcast %17 : vector<1x128xf32> to vector<16x128xf32>
    %19 = arith.addf %16, %18 : vector<16x128xf32>
    %c0_13 = arith.constant 0 : index
    %c0_14 = arith.constant 0 : index
    %20 = vector.load %arg6[%c0_13, %c0_14] : memref<16x128xf32, #tpu.memory_space<vmem>>, vector<16x128xf32>
    tpu.vector_store %arg6[%c0_13, %c0_14], %19 {strides = array<i32>} : memref<16x128xf32, #tpu.memory_space<vmem>>, vector<16x128xf32>,
    return
  }
  func.func @transform_0(%arg0: i32) -> (i32, i32) {
    %c0_i32 = arith.constant 0 : i32
    %c0_i32_0 = arith.constant 0 : i32
    return %arg0, %c0_i32 : i32, i32
  }
  func.func @transform_1(%arg0: i32) -> (i32, i32) {
    %c0_i32 = arith.constant 0 : i32
    %c0_i32_0 = arith.constant 0 : i32
    %c0_i32_1 = arith.constant 0 : i32
    return %c0_i32, %c0_i32_0 : i32, i32
  }
  func.func @transform_2(%arg0: i32) -> (i32, i32) {
    %c0_i32 = arith.constant 0 : i32
    %c0_i32_0 = arith.constant 0 : i32
    %c0_i32_1 = arith.constant 0 : i32
    return %c0_i32, %c0_i32_0 : i32, i32
  }
  func.func @transform_3(%arg0: i32) -> (i32, i32) {
    %c0_i32 = arith.constant 0 : i32
    %c0_i32_0 = arith.constant 0 : i32
    %c0_i32_1 = arith.constant 0 : i32
    return %c0_i32, %c0_i32_0 : i32, i32
  }
  func.func @transform_4(%arg0: i32) -> (i32, i32) {
    %c0_i32 = arith.constant 0 : i32
    %c0_i32_0 = arith.constant 0 : i32
    %c0_i32_1 = arith.constant 0 : i32
    return %c0_i32, %c0_i32_0 : i32, i32
  }
  func.func @transform_5(%arg0: i32) -> (i32, i32) {
    %c0_i32 = arith.constant 0 : i32
    %c0_i32_0 = arith.constant 0 : i32
    return %arg0, %c0_i32 : i32, i32
  }
}

</mosaic_0001>

<llo_original>
// kernel: _pose_regressor_impl.1
$region0: #{_pose_regressor_impl.1}
  #allocation0 [shape = 'u32[]', space=smem, size = 0x4, offset = 0x4, fixed_abs, tag = 'smem constant byte address 0x4 - core index']
  #allocation1 [shape = 'u32[144,128]{1,0:T(1,128)}', space=vmem, size = 0x12000, scoped, tag = 'internal scratch']
  %s0 = inlined_call_operand.hbm [shape: f32[16,32], index: 0, kind: input, shape index: {}]
  %s1 = inlined_call_operand.hbm [shape: f32[32,1024], index: 1, kind: input, shape index: {}]
  %s2 = inlined_call_operand.hbm [shape: f32[1,1024], index: 2, kind: input, shape index: {}]
  %s3 = inlined_call_operand.hbm [shape: bf16[1024,128], index: 3, kind: input, shape index: {}]
  %s4 = inlined_call_operand.vmem [shape: f32[1,128], index: 4, kind: input, shape index: {}]
  %s5 = inlined_call_operand.vmem [shape: f32[16,128], index: 5, kind: output, shape index: {}]
  %s6 = sld [smem:[#allocation0]]
  $region46: #{_pose_regressor_impl.1} parent=0
    _
  %s8 = ssub.s32 1, %s6
  %s9 = scalar_select 0, %s8, %s6
  $region1: #{_pose_regressor_impl.1} parent=0
    #allocation2 [shape = 'u8[8192]{0}', space=vmem, size = 0x2000, scoped, tag = 'input window, operand 0, single buffered']
    #allocation3 [shape = 's32[1]{0}', space=sflag, size = 0x4, scoped, tag = 'scoped memory for _pose_regressor_impl.1']
    #allocation4 [shape = 'u8[131072]{0}', space=vmem, size = 0x20000, scoped, tag = 'input window, operand 1, single buffered']
    #allocation5 [shape = 's32[1]{0}', space=sflag, size = 0x4, scoped, tag = 'scoped memory for _pose_regressor_impl.1']
    #allocation6 [shape = 'u8[4096]{0}', space=vmem, size = 0x1000, scoped, tag = 'input window, operand 2, single buffered']
    #allocation7 [shape = 'u8[262144]{0}', space=vmem, size = 0x40000, scoped, tag = 'input window, operand 3, single buffered']
    #allocation8 [shape = 's32[1]{0}', space=sflag, size = 0x4, scoped, tag = 'scoped memory for _pose_regressor_impl.1']
    %10 = vsyncpa [#allocation3], 0
    %11 = vsyncpa [#allocation5], 0
    %12 = vsyncpa [#allocation8], 0
    // Predicated region
    $region2: #{_pose_regressor_impl.1} parent=1 // pred_check
      _
    $region3: #{_pose_regressor_impl.1} parent=1 // pred_check_branch
      %14 = sbr.rel (0) target = $region5
    $region4: #{_pose_regressor_impl.1} parent=1 // pred_region
      %s16 = ssub.s32 256, 256
      %17 = vsyncadd [#allocation3], %s16
      %s18 = sshll.u32 [#allocation2], 4
      %s19 = int_to_ptr.vmem [resolvable:$true] %s18
      %24 = dma.hbm_to_vmem [thread:$0]  %s0, 256, %s19, [#allocation3], 128, 128, 8
    $region5: #{_pose_regressor_impl.1} parent=1 // pred_fallthru
      _
    // Predicated region
    $region6: #{_pose_regressor_impl.1} parent=1 // pred_check
      _
    $region7: #{_pose_regressor_impl.1} parent=1 // pred_check_branch
      %26 = sbr.rel (0) target = $region9
    $region8: #{_pose_regressor_impl.1} parent=1 // pred_region
      %s28 = ssub.s32 4096, 4096
      %29 = vsyncadd [#allocation5], %s28
      %s30 = sshll.u32 [#allocation4], 4
      %s31 = int_to_ptr.vmem [resolvable:$true] %s30
      %36 = dma.hbm_to_vmem [thread:$0]  %s1, 4096, %s31, [#allocation5], 1024, 1024, 64
    $region9: #{_pose_regressor_impl.1} parent=1 // pred_fallthru
      _
    // Predicated region
    $region10: #{_pose_regressor_impl.1} parent=1 // pred_check
      _
    $region11: #{_pose_regressor_impl.1} parent=1 // pred_check_branch
      %38 = sbr.rel (0) target = $region13
    $region12: #{_pose_regressor_impl.1} parent=1 // pred_region
      %s40 = ssub.s32 128, 128
      %41 = vsyncadd [#allocation5], %s40
      %s43 = sshll.u32 [#allocation6], 4
      %s44 = int_to_ptr.vmem [resolvable:$true] %s43
      %46 = dma.hbm_to_vmem [thread:$0]  %s2, 128, %s44, [#allocation5]
    $region13: #{_pose_regressor_impl.1} parent=1 // pred_fallthru
      _
    // Predicated region
    $region14: #{_pose_regressor_impl.1} parent=1 // pred_check
      _
    $region15: #{_pose_regressor_impl.1} parent=1 // pred_check_branch
      %48 = sbr.rel (0) target = $region17
    $region16: #{_pose_regressor_impl.1} parent=1 // pred_region
      %s50 = ssub.s32 8192, 8192
      %51 = vsyncadd [#allocation8], %s50
      %s52 = sshll.u32 [#allocation7], 4
      %s53 = int_to_ptr.vmem [resolvable:$true] %s52
      %58 = dma.hbm_to_vmem [thread:$0]  %s3, 8192, %s53, [#allocation8], 64, 64, 4
    $region17: #{_pose_regressor_impl.1} parent=1 // pred_fallthru
      _
    // Predicated region
    $region18: #{_pose_regressor_impl.1} parent=1 // pred_check
      _
    $region19: #{_pose_regressor_impl.1} parent=1 // pred_check_branch
      %60 = sbr.rel (0) target = $region21
    $region20: #{_pose_regressor_impl.1} parent=1 // pred_region
      _
    $region21: #{_pose_regressor_impl.1} parent=1 // pred_fallthru
      _
    // Predicated region
    $region22: #{_pose_regressor_impl.1} parent=1 // pred_check
      _
    $region23: #{_pose_regressor_impl.1} parent=1 // pred_check_branch
      %62 = sbr.rel (0) target = $region25
    $region24: #{_pose_regressor_impl.1} parent=1 // pred_region
      %63 = dma.done [#allocation3], 256
    $region25: #{_pose_regressor_impl.1} parent=1 // pred_fallthru
      _
    // Predicated region
    $region26: #{_pose_regressor_impl.1} parent=1 // pred_check
      _
    $region27: #{_pose_regressor_impl.1} parent=1 // pred_check_branch
      %65 = sbr.rel (0) target = $region29
    $region28: #{_pose_regressor_impl.1} parent=1 // pred_region
      %66 = dma.done [#allocation5], 4096
    $region29: #{_pose_regressor_impl.1} parent=1 // pred_fallthru
      _
    // Predicated region
    $region30: #{_pose_regressor_impl.1} parent=1 // pred_check
      _
    $region31: #{_pose_regressor_impl.1} parent=1 // pred_check_branch
      %68 = sbr.rel (0) target = $region33
    $region32: #{_pose_regressor_impl.1} parent=1 // pred_region
      %69 = dma.done [#allocation5], 128
    $region33: #{_pose_regressor_impl.1} parent=1 // pred_fallthru
      _
    // Predicated region
    $region34: #{_pose_regressor_impl.1} parent=1 // pred_check
      _
    $region35: #{_pose_regressor_impl.1} parent=1 // pred_check_branch
      %71 = sbr.rel (0) target = $region37
    $region36: #{_pose_regressor_impl.1} parent=1 // pred_region
      %72 = dma.done [#allocation8], 8192
    $region37: #{_pose_regressor_impl.1} parent=1 // pred_fallthru
      _
    %v77 = vld [vmem:[#allocation2] sm:$0xff]
    %v78 = vld [vmem:[#allocation2 + $0x8] sm:$0xff]
    %v79 = vld [vmem:[#allocation4] sm:$0xff]
    %v80 = vld [vmem:[#allocation4 + $0x8] sm:$0xff]
    %v81 = vld [vmem:[#allocation4 + $0x10] sm:$0xff]
    %v82 = vld [vmem:[#allocation4 + $0x18] sm:$0xff]
    %v83 = vld [vmem:[#allocation4 + $0x20] sm:$0xff]
    %v84 = vld [vmem:[#allocation4 + $0x28] sm:$0xff]
    %v85 = vld [vmem:[#allocation4 + $0x30] sm:$0xff]
    %v86 = vld [vmem:[#allocation4 + $0x38] sm:$0xff]
    %v87 = vld [vmem:[#allocation4 + $0x40] sm:$0xff]
    %v88 = vld [vmem:[#allocation4 + $0x48] sm:$0xff]
    %v89 = vld [vmem:[#allocation4 + $0x50] sm:$0xff]
    %v90 = vld [vmem:[#allocation4 + $0x58] sm:$0xff]
    %v91 = vld [vmem:[#allocation4 + $0x60] sm:$0xff]
    %v92 = vld [vmem:[#allocation4 + $0x68] sm:$0xff]
    %v93 = vld [vmem:[#allocation4 + $0x70] sm:$0xff]
    %v94 = vld [vmem:[#allocation4 + $0x78] sm:$0xff]
    %v95 = vld [vmem:[#allocation4 + $0x80] sm:$0xff]
    %v96 = vld [vmem:[#allocation4 + $0x88] sm:$0xff]
    %v97 = vld [vmem:[#allocation4 + $0x90] sm:$0xff]
    %v98 = vld [vmem:[#allocation4 + $0x98] sm:$0xff]
    %v99 = vld [vmem:[#allocation4 + $0xa0] sm:$0xff]
    %v100 = vld [vmem:[#allocation4 + $0xa8] sm:$0xff]
    %v101 = vld [vmem:[#allocation4 + $0xb0] sm:$0xff]
    %v102 = vld [vmem:[#allocation4 + $0xb8] sm:$0xff]
    %v103 = vld [vmem:[#allocation4 + $0xc0] sm:$0xff]
    %v104 = vld [vmem:[#allocation4 + $0xc8] sm:$0xff]
    %v105 = vld [vmem:[#allocation4 + $0xd0] sm:$0xff]
    %v106 = vld [vmem:[#allocation4 + $0xd8] sm:$0xff]
    %v107 = vld [vmem:[#allocation4 + $0xe0] sm:$0xff]
    %v108 = vld [vmem:[#allocation4 + $0xe8] sm:$0xff]
    %v109 = vld [vmem:[#allocation4 + $0xf0] sm:$0xff]
    %v110 = vld [vmem:[#allocation4 + $0xf8] sm:$0xff]
    %v111 = vld [vmem:[#allocation6] sm:$0xff]
    %v113 = vlaneseq
    %v114 = vshrl.u32 %v113, 7
    %v115 = vsub.s32 0, %v114
    %v116 = vrot.slane %v111, %v115
    %v117 = vlaneseq
    %v118 = vshrl.u32 %v117, 7
    %v119 = vsub.s32 1, %v118
    %v120 = vrot.slane %v111, %v119
    %v121 = vlaneseq
    %v122 = vshrl.u32 %v121, 7
    %v123 = vsub.s32 2, %v122
    %v124 = vrot.slane %v111, %v123
    %v125 = vlaneseq
    %v126 = vshrl.u32 %v125, 7
    %v127 = vsub.s32 3, %v126
    %v128 = vrot.slane %v111, %v127
    %v129 = vlaneseq
    %v130 = vshrl.u32 %v129, 7
    %v131 = vsub.s32 4, %v130
    %v132 = vrot.slane %v111, %v131
    %v133 = vlaneseq
    %v134 = vshrl.u32 %v133, 7
    %v135 = vsub.s32 5, %v134
    %v136 = vrot.slane %v111, %v135
    %v137 = vlaneseq
    %v138 = vshrl.u32 %v137, 7
    %v139 = vsub.s32 6, %v138
    %v140 = vrot.slane %v111, %v139
    %v141 = vlaneseq
    %v142 = vshrl.u32 %v141, 7
    %v143 = vsub.s32 7, %v142
    %v144 = vrot.slane %v111, %v143
    %vm153 = vcmask 261120
    %v155 = vsel %vm153, %v77, 0
    %v158 = vsel %vm153, %v78, 0
    %160 = vmatprep.subr.mxu0 %v80
    %161 = vmatpush1.msra.mxu0 %v79
    %162 = vmatprep.subr.mxu0 %v88
    %163 = vmatpush1.msra.mxu0 %v87
    %164 = vmatprep.subr.mxu0 %v96
    %165 = vmatpush1.msra.mxu0 %v95
    %166 = vmatprep.subr.mxu0 %v104
    %167 = vmatpush1.msra.mxu0 %v103
    %168 = vmatprep.subr.mxu0 0.0
    %169 = vmatpush1.msra.mxu0 0.0
    %170 = vmatprep.subr.mxu0 0.0
    %171 = vmatpush1.msra.mxu0 0.0
    %172 = vmatprep.subr.mxu0 0.0
    %173 = vmatpush1.msra.mxu0 0.0
    %174 = vmatprep.subr.mxu0 0.0
    %175 = vmatpush1.msra.mxu0 0.0
    %176 = vmatprep.subr.mxu0 0.0
    %177 = vmatpush1.msra.mxu0 0.0
    %178 = vmatprep.subr.mxu0 0.0
    %179 = vmatpush1.msra.mxu0 0.0
    %180 = vmatprep.subr.mxu0 0.0
    %181 = vmatpush1.msra.mxu0 0.0
    %182 = vmatprep.subr.mxu0 0.0
    %183 = vmatpush1.msra.mxu0 0.0
    %184 = vmatprep.subr.mxu0 0.0
    %185 = vmatpush1.msra.mxu0 0.0
    %186 = vmatprep.subr.mxu0 0.0
    %187 = vmatpush1.msra.mxu0 0.0
    %188 = vmatprep.subr.mxu0 0.0
    %189 = vmatpush1.msra.mxu0 0.0
    %190 = vmatprep.subr.mxu0 0.0
    %191 = vmatpush1.msra.mxu0 0.0
    %192 = vmatprep.subr.mxu0 0.0
    %193 = vmatpush1.msra.mxu0 0.0
    %194 = vmatprep.subr.mxu0 0.0
    %195 = vmatpush1.msra.mxu0 0.0
    %196 = vmatprep.subr.mxu0 0.0
    %197 = vmatpush1.msra.mxu0 0.0
    %198 = vmatprep.subr.mxu0 0.0
    %199 = vmatpush1.msra.mxu0 0.0
    %200 = vmatprep.subr.mxu0 0.0
    %201 = vmatpush1.msra.mxu0 0.0
    %202 = vmatprep.subr.mxu0 0.0
    %203 = vmatpush1.msra.mxu0 0.0
    %204 = vmatprep.subr.mxu0 0.0
    %205 = vmatpush1.msra.mxu0 0.0
    %206 = vmatprep.subr.mxu0 0.0
    %207 = vmatpush1.msra.mxu0 0.0
    %208 = vmatprep.subr.mxu0 0.0
    %209 = vmatpush1.msra.mxu0 0.0
    %210 = vmatprep.subr.mxu0 0.0
    %211 = vmatpush1.msra.mxu0 0.0
    %212 = vmatprep.subr.mxu0 0.0
    %213 = vmatpush1.msra.mxu0 0.0
    %214 = vmatprep.subr.mxu0 0.0
    %215 = vmatpush1.msra.mxu0 0.0
    %216 = vmatprep.subr.mxu0 0.0
    %217 = vmatpush1.msra.mxu0 0.0
    %218 = vmatprep.subr.mxu0 0.0
    %219 = vmatpush1.msra.mxu0 0.0
    %220 = vmatprep.subr.mxu0 0.0
    %221 = vmatpush1.msra.mxu0 0.0
    %222 = vmatprep.subr.mxu0 0.0
    %223 = vmatpush1.msra.mxu0 0.0
    %224 = vmatprep.mubr.f32.mxu0 0.0
    %225 = vmatmul.mubr.f32.gmra.mrb[0].mxu0 %v155
    %v226 = vpop.f32.mrb[0].mxu0
    %v227 = vadd.f32 %v116, %v226
    %v228 = vpop.f32.mrb[0].mxu0
    %v229 = vadd.f32 %v120, %v228
    %230 = vmatprep.mubr.f32.mxu0 0.0
    %231 = vmatmul.mubr.f32.gmra.mrb[0].mxu0 %v158
    %v232 = vpop.f32.mrb[0].mxu0
    %v233 = vadd.f32 %v116, %v232
    %v234 = vpop.f32.mrb[0].mxu0
    %v235 = vadd.f32 %v120, %v234
    %236 = vdwg.mxu0
    %237 = vmatprep.subr.mxu0 %v82
    %238 = vmatpush1.msra.mxu0 %v81
    %239 = vmatprep.subr.mxu0 %v90
    %240 = vmatpush1.msra.mxu0 %v89
    %241 = vmatprep.subr.mxu0 %v98
    %242 = vmatpush1.msra.mxu0 %v97
    %243 = vmatprep.subr.mxu0 %v106
    %244 = vmatpush1.msra.mxu0 %v105
    %245 = vmatprep.subr.mxu0 0.0
    %246 = vmatpush1.msra.mxu0 0.0
    %247 = vmatprep.subr.mxu0 0.0
    %248 = vmatpush1.msra.mxu0 0.0
    %249 = vmatprep.subr.mxu0 0.0
    %250 = vmatpush1.msra.mxu0 0.0
    %251 = vmatprep.subr.mxu0 0.0
    %252 = vmatpush1.msra.mxu0 0.0
    %253 = vmatprep.subr.mxu0 0.0
    %254 = vmatpush1.msra.mxu0 0.0
    %255 = vmatprep.subr.mxu0 0.0
    %256 = vmatpush1.msra.mxu0 0.0
    %257 = vmatprep.subr.mxu0 0.0
    %258 = vmatpush1.msra.mxu0 0.0
    %259 = vmatprep.subr.mxu0 0.0
    %260 = vmatpush1.msra.mxu0 0.0
    %261 = vmatprep.subr.mxu0 0.0
    %262 = vmatpush1.msra.mxu0 0.0
    %263 = vmatprep.subr.mxu0 0.0
    %264 = vmatpush1.msra.mxu0 0.0
    %265 = vmatprep.subr.mxu0 0.0
    %266 = vmatpush1.msra.mxu0 0.0
    %267 = vmatprep.subr.mxu0 0.0
    %268 = vmatpush1.msra.mxu0 0.0
    %269 = vmatprep.subr.mxu0 0.0
    %270 = vmatpush1.msra.mxu0 0.0
    %271 = vmatprep.subr.mxu0 0.0
    %272 = vmatpush1.msra.mxu0 0.0
    %273 = vmatprep.subr.mxu0 0.0
    %274 = vmatpush1.msra.mxu0 0.0
    %275 = vmatprep.subr.mxu0 0.0
    %276 = vmatpush1.msra.mxu0 0.0
    %277 = vmatprep.subr.mxu0 0.0
    %278 = vmatpush1.msra.mxu0 0.0
    %279 = vmatprep.subr.mxu0 0.0
    %280 = vmatpush1.msra.mxu0 0.0
    %281 = vmatprep.subr.mxu0 0.0
    %282 = vmatpush1.msra.mxu0 0.0
    %283 = vmatprep.subr.mxu0 0.0
    %284 = vmatpush1.msra.mxu0 0.0
    %285 = vmatprep.subr.mxu0 0.0
    %286 = vmatpush1.msra.mxu0 0.0
    %287 = vmatprep.subr.mxu0 0.0
    %288 = vmatpush1.msra.mxu0 0.0
    %289 = vmatprep.subr.mxu0 0.0
    %290 = vmatpush1.msra.mxu0 0.0
    %291 = vmatprep.subr.mxu0 0.0
    %292 = vmatpush1.msra.mxu0 0.0
    %293 = vmatprep.subr.mxu0 0.0
    %294 = vmatpush1.msra.mxu0 0.0
    %295 = vmatprep.subr.mxu0 0.0
    %296 = vmatpush1.msra.mxu0 0.0
    %297 = vmatprep.subr.mxu0 0.0
    %298 = vmatpush1.msra.mxu0 0.0
    %299 = vmatprep.subr.mxu0 0.0
    %300 = vmatpush1.msra.mxu0 0.0
    %301 = vmatprep.mubr.f32.mxu0 0.0
    %302 = vmatmul.mubr.f32.gmra.mrb[0].mxu0 %v155
    %v303 = vpop.f32.mrb[0].mxu0
    %v304 = vadd.f32 %v124, %v303
    %v305 = vpop.f32.mrb[0].mxu0
    %v306 = vadd.f32 %v128, %v305
    %307 = vmatprep.mubr.f32.mxu0 0.0
    %308 = vmatmul.mubr.f32.gmra.mrb[0].mxu0 %v158
    %v309 = vpop.f32.mrb[0].mxu0
    %v310 = vadd.f32 %v124, %v309
    %v311 = vpop.f32.mrb[0].mxu0
    %v312 = vadd.f32 %v128, %v311
    %313 = vdwg.mxu0
    %314 = vmatprep.subr.mxu0 %v84
    %315 = vmatpush1.msra.mxu0 %v83
    %316 = vmatprep.subr.mxu0 %v92
    %317 = vmatpush1.msra.mxu0 %v91
    %318 = vmatprep.subr.mxu0 %v100
    %319 = vmatpush1.msra.mxu0 %v99
    %320 = vmatprep.subr.mxu0 %v108
    %321 = vmatpush1.msra.mxu0 %v107
    %322 = vmatprep.subr.mxu0 0.0
    %323 = vmatpush1.msra.mxu0 0.0
    %324 = vmatprep.subr.mxu0 0.0
    %325 = vmatpush1.msra.mxu0 0.0
    %326 = vmatprep.subr.mxu0 0.0
    %327 = vmatpush1.msra.mxu0 0.0
    %328 = vmatprep.subr.mxu0 0.0
    %329 = vmatpush1.msra.mxu0 0.0
    %330 = vmatprep.subr.mxu0 0.0
    %331 = vmatpush1.msra.mxu0 0.0
    %332 = vmatprep.subr.mxu0 0.0
    %333 = vmatpush1.msra.mxu0 0.0
    %334 = vmatprep.subr.mxu0 0.0
    %335 = vmatpush1.msra.mxu0 0.0
    %336 = vmatprep.subr.mxu0 0.0
    %337 = vmatpush1.msra.mxu0 0.0
    %338 = vmatprep.subr.mxu0 0.0
    %339 = vmatpush1.msra.mxu0 0.0
    %340 = vmatprep.subr.mxu0 0.0
    %341 = vmatpush1.msra.mxu0 0.0
    %342 = vmatprep.subr.mxu0 0.0
    %343 = vmatpush1.msra.mxu0 0.0
    %344 = vmatprep.subr.mxu0 0.0
    %345 = vmatpush1.msra.mxu0 0.0
    %346 = vmatprep.subr.mxu0 0.0
    %347 = vmatpush1.msra.mxu0 0.0
    %348 = vmatprep.subr.mxu0 0.0
    %349 = vmatpush1.msra.mxu0 0.0
    %350 = vmatprep.subr.mxu0 0.0
    %351 = vmatpush1.msra.mxu0 0.0
    %352 = vmatprep.subr.mxu0 0.0
    %353 = vmatpush1.msra.mxu0 0.0
    %354 = vmatprep.subr.mxu0 0.0
    %355 = vmatpush1.msra.mxu0 0.0
    %356 = vmatprep.subr.mxu0 0.0
    %357 = vmatpush1.msra.mxu0 0.0
    %358 = vmatprep.subr.mxu0 0.0
    %359 = vmatpush1.msra.mxu0 0.0
    %360 = vmatprep.subr.mxu0 0.0
    %361 = vmatpush1.msra.mxu0 0.0
    %362 = vmatprep.subr.mxu0 0.0
    %363 = vmatpush1.msra.mxu0 0.0
    %364 = vmatprep.subr.mxu0 0.0
    %365 = vmatpush1.msra.mxu0 0.0
    %366 = vmatprep.subr.mxu0 0.0
    %367 = vmatpush1.msra.mxu0 0.0
    %368 = vmatprep.subr.mxu0 0.0
    %369 = vmatpush1.msra.mxu0 0.0
    %370 = vmatprep.subr.mxu0 0.0
    %371 = vmatpush1.msra.mxu0 0.0
    %372 = vmatprep.subr.mxu0 0.0
    %373 = vmatpush1.msra.mxu0 0.0
    %374 = vmatprep.subr.mxu0 0.0
    %375 = vmatpush1.msra.mxu0 0.0
    %376 = vmatprep.subr.mxu0 0.0
    %377 = vmatpush1.msra.mxu0 0.0
    %378 = vmatprep.mubr.f32.mxu0 0.0
    %379 = vmatmul.mubr.f32.gmra.mrb[0].mxu0 %v155
    %v380 = vpop.f32.mrb[0].mxu0
    %v381 = vadd.f32 %v132, %v380
    %v382 = vpop.f32.mrb[0].mxu0
    %v383 = vadd.f32 %v136, %v382
    %384 = vmatprep.mubr.f32.mxu0 0.0
    %385 = vmatmul.mubr.f32.gmra.mrb[0].mxu0 %v158
    %v386 = vpop.f32.mrb[0].mxu0
    %v387 = vadd.f32 %v132, %v386
    %v388 = vpop.f32.mrb[0].mxu0
    %v389 = vadd.f32 %v136, %v388
    %390 = vdwg.mxu0
    %391 = vmatprep.subr.mxu0 %v86
    %392 = vmatpush1.msra.mxu0 %v85
    %393 = vmatprep.subr.mxu0 %v94
    %394 = vmatpush1.msra.mxu0 %v93
    %395 = vmatprep.subr.mxu0 %v102
    %396 = vmatpush1.msra.mxu0 %v101
    %397 = vmatprep.subr.mxu0 %v110
    %398 = vmatpush1.msra.mxu0 %v109
    %399 = vmatprep.subr.mxu0 0.0
    %400 = vmatpush1.msra.mxu0 0.0
    %401 = vmatprep.subr.mxu0 0.0
    %402 = vmatpush1.msra.mxu0 0.0
    %403 = vmatprep.subr.mxu0 0.0
    %404 = vmatpush1.msra.mxu0 0.0
    %405 = vmatprep.subr.mxu0 0.0
    %406 = vmatpush1.msra.mxu0 0.0
    %407 = vmatprep.subr.mxu0 0.0
    %408 = vmatpush1.msra.mxu0 0.0
    %409 = vmatprep.subr.mxu0 0.0
    %410 = vmatpush1.msra.mxu0 0.0
    %411 = vmatprep.subr.mxu0 0.0
    %412 = vmatpush1.msra.mxu0 0.0
    %413 = vmatprep.subr.mxu0 0.0
    %414 = vmatpush1.msra.mxu0 0.0
    %415 = vmatprep.subr.mxu0 0.0
    %416 = vmatpush1.msra.mxu0 0.0
    %417 = vmatprep.subr.mxu0 0.0
    %418 = vmatpush1.msra.mxu0 0.0
    %419 = vmatprep.subr.mxu0 0.0
    %420 = vmatpush1.msra.mxu0 0.0
    %421 = vmatprep.subr.mxu0 0.0
    %422 = vmatpush1.msra.mxu0 0.0
    %423 = vmatprep.subr.mxu0 0.0
    %424 = vmatpush1.msra.mxu0 0.0
    %425 = vmatprep.subr.mxu0 0.0
    %426 = vmatpush1.msra.mxu0 0.0
    %427 = vmatprep.subr.mxu0 0.0
    %428 = vmatpush1.msra.mxu0 0.0
    %429 = vmatprep.subr.mxu0 0.0
    %430 = vmatpush1.msra.mxu0 0.0
    %431 = vmatprep.subr.mxu0 0.0
    %432 = vmatpush1.msra.mxu0 0.0
    %433 = vmatprep.subr.mxu0 0.0
    %434 = vmatpush1.msra.mxu0 0.0
    %435 = vmatprep.subr.mxu0 0.0
    %436 = vmatpush1.msra.mxu0 0.0
    %437 = vmatprep.subr.mxu0 0.0
    %438 = vmatpush1.msra.mxu0 0.0
    %439 = vmatprep.subr.mxu0 0.0
    %440 = vmatpush1.msra.mxu0 0.0
    %441 = vmatprep.subr.mxu0 0.0
    %442 = vmatpush1.msra.mxu0 0.0
    %443 = vmatprep.subr.mxu0 0.0
    %444 = vmatpush1.msra.mxu0 0.0
    %445 = vmatprep.subr.mxu0 0.0
    %446 = vmatpush1.msra.mxu0 0.0
    %447 = vmatprep.subr.mxu0 0.0
    %448 = vmatpush1.msra.mxu0 0.0
    %449 = vmatprep.subr.mxu0 0.0
    %450 = vmatpush1.msra.mxu0 0.0
    %451 = vmatprep.subr.mxu0 0.0
    %452 = vmatpush1.msra.mxu0 0.0
    %453 = vmatprep.subr.mxu0 0.0
    %454 = vmatpush1.msra.mxu0 0.0
    %455 = vmatprep.mubr.f32.mxu0 0.0
    %456 = vmatmul.mubr.f32.gmra.mrb[0].mxu0 %v155
    %v457 = vpop.f32.mrb[0].mxu0
    %v458 = vadd.f32 %v140, %v457
    %v459 = vpop.f32.mrb[0].mxu0
    %v460 = vadd.f32 %v144, %v459
    %461 = vmatprep.mubr.f32.mxu0 0.0
    %462 = vmatmul.mubr.f32.gmra.mrb[0].mxu0 %v158
    %v463 = vpop.f32.mrb[0].mxu0
    %v464 = vadd.f32 %v140, %v463
    %v465 = vpop.f32.mrb[0].mxu0
    %v466 = vadd.f32 %v144, %v465
    %467 = vdwg.mxu0
    %v468 = vpack.c.bf16 %v233, %v227
    %v469 = vpack.c.bf16 %v235, %v229
    %v470 = vpack.c.bf16 %v310, %v304
    %v471 = vpack.c.bf16 %v312, %v306
    %v472 = vpack.c.bf16 %v387, %v381
    %v473 = vpack.c.bf16 %v389, %v383
    %v474 = vpack.c.bf16 %v464, %v458
    %v475 = vpack.c.bf16 %v466, %v460
    %v476 = vmul.bf16 %v468, 1056980736
    %v477 = vmul.bf16 %v469, 1056980736
    %v478 = vmul.bf16 %v470, 1056980736
    %v479 = vmul.bf16 %v471, 1056980736
    %v480 = vmul.bf16 %v472, 1056980736
    %v481 = vmul.bf16 %v473, 1056980736
    %v482 = vmul.bf16 %v474, 1056980736
    %v483 = vmul.bf16 %v475, 1056980736
    %v484 = vmul.bf16 %v468, 1060454197
    %v485 = vmul.bf16 %v469, 1060454197
    %v486 = vmul.bf16 %v470, 1060454197
    %v487 = vmul.bf16 %v471, 1060454197
    %v488 = vmul.bf16 %v472, 1060454197
    %v489 = vmul.bf16 %v473, 1060454197
    %v490 = vmul.bf16 %v474, 1060454197
    %v491 = vmul.bf16 %v475, 1060454197
    %v492 = verf.bf16.pop %v484
    %v493 = verf.bf16.pop %v485
    %v494 = verf.bf16.pop %v486
    %v495 = verf.bf16.pop %v487
    %v496 = verf.bf16.pop %v488
    %v497 = verf.bf16.pop %v489
    %v498 = verf.bf16.pop %v490
    %v499 = verf.bf16.pop %v491
    %v500 = vadd.bf16 %v492, 1065369472
    %v501 = vadd.bf16 %v493, 1065369472
    %v502 = vadd.bf16 %v494, 1065369472
    %v503 = vadd.bf16 %v495, 1065369472
    %v504 = vadd.bf16 %v496, 1065369472
    %v505 = vadd.bf16 %v497, 1065369472
    %v506 = vadd.bf16 %v498, 1065369472
    %v507 = vadd.bf16 %v499, 1065369472
    %v508 = vmul.bf16 %v476, %v500
    %v509 = vmul.bf16 %v477, %v501
    %v510 = vmul.bf16 %v478, %v502
    %v511 = vmul.bf16 %v479, %v503
    %v512 = vmul.bf16 %v480, %v504
    %v513 = vmul.bf16 %v481, %v505
    %v514 = vmul.bf16 %v482, %v506
    %v515 = vmul.bf16 %v483, %v507
    %v516 = vld [vmem:[#allocation7] sm:$0xf]
    %v517 = vld [vmem:[#allocation7 + $0x4] sm:$0xf]
    %v518 = vld [vmem:[#allocation7 + $0x8] sm:$0xf]
    %v519 = vld [vmem:[#allocation7 + $0xc] sm:$0xf]
    %v520 = vld [vmem:[#allocation7 + $0x10] sm:$0xf]
    %v521 = vld [vmem:[#allocation7 + $0x14] sm:$0xf]
    %v522 = vld [vmem:[#allocation7 + $0x18] sm:$0xf]
    %v523 = vld [vmem:[#allocation7 + $0x1c] sm:$0xf]
    %v524 = vld [vmem:[#allocation7 + $0x20] sm:$0xf]
    %v525 = vld [vmem:[#allocation7 + $0x24] sm:$0xf]
    %v526 = vld [vmem:[#allocation7 + $0x28] sm:$0xf]
    %v527 = vld [vmem:[#allocation7 + $0x2c] sm:$0xf]
    %v528 = vld [vmem:[#allocation7 + $0x30] sm:$0xf]
    %v529 = vld [vmem:[#allocation7 + $0x34] sm:$0xf]
    %v530 = vld [vmem:[#allocation7 + $0x38] sm:$0xf]
    %v531 = vld [vmem:[#allocation7 + $0x3c] sm:$0xf]
    %v532 = vld [vmem:[#allocation7 + $0x40] sm:$0xf]
    %v533 = vld [vmem:[#allocation7 + $0x44] sm:$0xf]
    %v534 = vld [vmem:[#allocation7 + $0x48] sm:$0xf]
    %v535 = vld [vmem:[#allocation7 + $0x4c] sm:$0xf]
    %v536 = vld [vmem:[#allocation7 + $0x50] sm:$0xf]
    %v537 = vld [vmem:[#allocation7 + $0x54] sm:$0xf]
    %v538 = vld [vmem:[#allocation7 + $0x58] sm:$0xf]
    %v539 = vld [vmem:[#allocation7 + $0x5c] sm:$0xf]
    %v540 = vld [vmem:[#allocation7 + $0x60] sm:$0xf]
    %v541 = vld [vmem:[#allocation7 + $0x64] sm:$0xf]
    %v542 = vld [vmem:[#allocation7 + $0x68] sm:$0xf]
    %v543 = vld [vmem:[#allocation7 + $0x6c] sm:$0xf]
    %v544 = vld [vmem:[#allocation7 + $0x70] sm:$0xf]
    %v545 = vld [vmem:[#allocation7 + $0x74] sm:$0xf]
    %v546 = vld [vmem:[#allocation7 + $0x78] sm:$0xf]
    %v547 = vld [vmem:[#allocation7 + $0x7c] sm:$0xf]
    %v548 = vld [vmem:[#allocation7 + $0x80] sm:$0xf]
    %v549 = vld [vmem:[#allocation7 + $0x84] sm:$0xf]
    %v550 = vld [vmem:[#allocation7 + $0x88] sm:$0xf]
    %v551 = vld [vmem:[#allocation7 + $0x8c] sm:$0xf]
    %v552 = vld [vmem:[#allocation7 + $0x90] sm:$0xf]
    %v553 = vld [vmem:[#allocation7 + $0x94] sm:$0xf]
    %v554 = vld [vmem:[#allocation7 + $0x98] sm:$0xf]
    %v555 = vld [vmem:[#allocation7 + $0x9c] sm:$0xf]
    %v556 = vld [vmem:[#allocation7 + $0xa0] sm:$0xf]
    %v557 = vld [vmem:[#allocation7 + $0xa4] sm:$0xf]
    %v558 = vld [vmem:[#allocation7 + $0xa8] sm:$0xf]
    %v559 = vld [vmem:[#allocation7 + $0xac] sm:$0xf]
    %v560 = vld [vmem:[#allocation7 + $0xb0] sm:$0xf]
    %v561 = vld [vmem:[#allocation7 + $0xb4] sm:$0xf]
    %v562 = vld [vmem:[#allocation7 + $0xb8] sm:$0xf]
    %v563 = vld [vmem:[#allocation7 + $0xbc] sm:$0xf]
    %v564 = vld [vmem:[#allocation7 + $0xc0] sm:$0xf]
    %v565 = vld [vmem:[#allocation7 + $0xc4] sm:$0xf]
    %v566 = vld [vmem:[#allocation7 + $0xc8] sm:$0xf]
    %v567 = vld [vmem:[#allocation7 + $0xcc] sm:$0xf]
    %v568 = vld [vmem:[#allocation7 + $0xd0] sm:$0xf]
    %v569 = vld [vmem:[#allocation7 + $0xd4] sm:$0xf]
    %v570 = vld [vmem:[#allocation7 + $0xd8] sm:$0xf]
    %v571 = vld [vmem:[#allocation7 + $0xdc] sm:$0xf]
    %v572 = vld [vmem:[#allocation7 + $0xe0] sm:$0xf]
    %v573 = vld [vmem:[#allocation7 + $0xe4] sm:$0xf]
    %v574 = vld [vmem:[#allocation7 + $0xe8] sm:$0xf]
    %v575 = vld [vmem:[#allocation7 + $0xec] sm:$0xf]
    %v576 = vld [vmem:[#allocation7 + $0xf0] sm:$0xf]
    %v577 = vld [vmem:[#allocation7 + $0xf4] sm:$0xf]
    %v578 = vld [vmem:[#allocation7 + $0xf8] sm:$0xf]
    %v579 = vld [vmem:[#allocation7 + $0xfc] sm:$0xf]
    %v580 = vld [vmem:[#allocation7 + $0x100] sm:$0xf]
    %v581 = vld [vmem:[#allocation7 + $0x104] sm:$0xf]
    %v582 = vld [vmem:[#allocation7 + $0x108] sm:$0xf]
    %v583 = vld [vmem:[#allocation7 + $0x10c] sm:$0xf]
    %v584 = vld [vmem:[#allocation7 + $0x110] sm:$0xf]
    %v585 = vld [vmem:[#allocation7 + $0x114] sm:$0xf]
    %v586 = vld [vmem:[#allocation7 + $0x118] sm:$0xf]
    %v587 = vld [vmem:[#allocation7 + $0x11c] sm:$0xf]
    %v588 = vld [vmem:[#allocation7 + $0x120] sm:$0xf]
    %v589 = vld [vmem:[#allocation7 + $0x124] sm:$0xf]
    %v590 = vld [vmem:[#allocation7 + $0x128] sm:$0xf]
    %v591 = vld [vmem:[#allocation7 + $0x12c] sm:$0xf]
    %v592 = vld [vmem:[#allocation7 + $0x130] sm:$0xf]
    %v593 = vld [vmem:[#allocation7 + $0x134] sm:$0xf]
    %v594 = vld [vmem:[#allocation7 + $0x138] sm:$0xf]
    %v595 = vld [vmem:[#allocation7 + $0x13c] sm:$0xf]
    %v596 = vld [vmem:[#allocation7 + $0x140] sm:$0xf]
    %v597 = vld [vmem:[#allocation7 + $0x144] sm:$0xf]
    %v598 = vld [vmem:[#allocation7 + $0x148] sm:$0xf]
    %v599 = vld [vmem:[#allocation7 + $0x14c] sm:$0xf]
    %v600 = vld [vmem:[#allocation7 + $0x150] sm:$0xf]
    %v601 = vld [vmem:[#allocation7 + $0x154] sm:$0xf]
    %v602 = vld [vmem:[#allocation7 + $0x158] sm:$0xf]
    %v603 = vld [vmem:[#allocation7 + $0x15c] sm:$0xf]
    %v604 = vld [vmem:[#allocation7 + $0x160] sm:$0xf]
    %v605 = vld [vmem:[#allocation7 + $0x164] sm:$0xf]
    %v606 = vld [vmem:[#allocation7 + $0x168] sm:$0xf]
    %v607 = vld [vmem:[#allocation7 + $0x16c] sm:$0xf]
    %v608 = vld [vmem:[#allocation7 + $0x170] sm:$0xf]
    %v609 = vld [vmem:[#allocation7 + $0x174] sm:$0xf]
    %v610 = vld [vmem:[#allocation7 + $0x178] sm:$0xf]
    %v611 = vld [vmem:[#allocation7 + $0x17c] sm:$0xf]
    %v612 = vld [vmem:[#allocation7 + $0x180] sm:$0xf]
    %v613 = vld [vmem:[#allocation7 + $0x184] sm:$0xf]
    %v614 = vld [vmem:[#allocation7 + $0x188] sm:$0xf]
    %v615 = vld [vmem:[#allocation7 + $0x18c] sm:$0xf]
    %v616 = vld [vmem:[#allocation7 + $0x190] sm:$0xf]
    %v617 = vld [vmem:[#allocation7 + $0x194] sm:$0xf]
    %v618 = vld [vmem:[#allocation7 + $0x198] sm:$0xf]
    %v619 = vld [vmem:[#allocation7 + $0x19c] sm:$0xf]
    %v620 = vld [vmem:[#allocation7 + $0x1a0] sm:$0xf]
    %v621 = vld [vmem:[#allocation7 + $0x1a4] sm:$0xf]
    %v622 = vld [vmem:[#allocation7 + $0x1a8] sm:$0xf]
    %v623 = vld [vmem:[#allocation7 + $0x1ac] sm:$0xf]
    %v624 = vld [vmem:[#allocation7 + $0x1b0] sm:$0xf]
    %v625 = vld [vmem:[#allocation7 + $0x1b4] sm:$0xf]
    %v626 = vld [vmem:[#allocation7 + $0x1b8] sm:$0xf]
    %v627 = vld [vmem:[#allocation7 + $0x1bc] sm:$0xf]
    %v628 = vld [vmem:[#allocation7 + $0x1c0] sm:$0xf]
    %v629 = vld [vmem:[#allocation7 + $0x1c4] sm:$0xf]
    %v630 = vld [vmem:[#allocation7 + $0x1c8] sm:$0xf]
    %v631 = vld [vmem:[#allocation7 + $0x1cc] sm:$0xf]
    %v632 = vld [vmem:[#allocation7 + $0x1d0] sm:$0xf]
    %v633 = vld [vmem:[#allocation7 + $0x1d4] sm:$0xf]
    %v634 = vld [vmem:[#allocation7 + $0x1d8] sm:$0xf]
    %v635 = vld [vmem:[#allocation7 + $0x1dc] sm:$0xf]
    %v636 = vld [vmem:[#allocation7 + $0x1e0] sm:$0xf]
    %v637 = vld [vmem:[#allocation7 + $0x1e4] sm:$0xf]
    %v638 = vld [vmem:[#allocation7 + $0x1e8] sm:$0xf]
    %v639 = vld [vmem:[#allocation7 + $0x1ec] sm:$0xf]
    %v640 = vld [vmem:[#allocation7 + $0x1f0] sm:$0xf]
    %v641 = vld [vmem:[#allocation7 + $0x1f4] sm:$0xf]
    %v642 = vld [vmem:[#allocation7 + $0x1f8] sm:$0xf]
    %v643 = vld [vmem:[#allocation7 + $0x1fc] sm:$0xf]
    %v644 = vld [vmem:[%s4] sm:$0x1]
    %v646 = vlaneseq
    %v647 = vshrl.u32 %v646, 7
    %v648 = vsub.s32 0, %v647
    %v649 = vrot.slane %v644, %v648
    %v779 = vunpack.c.l.b16 %v516
    %v780 = vunpack.c.l.b16 %v517
    %v781 = vunpack.c.l.b16 %v518
    %v782 = vunpack.c.l.b16 %v519
    %v783 = vunpack.c.l.b16 %v520
    %v784 = vunpack.c.l.b16 %v521
    %v785 = vunpack.c.l.b16 %v522
    %v786 = vunpack.c.l.b16 %v523
    %v787 = vunpack.c.l.b16 %v524
    %v788 = vunpack.c.l.b16 %v525
    %v789 = vunpack.c.l.b16 %v526
    %v790 = vunpack.c.l.b16 %v527
    %v791 = vunpack.c.l.b16 %v528
    %v792 = vunpack.c.l.b16 %v529
    %v793 = vunpack.c.l.b16 %v530
    %v794 = vunpack.c.l.b16 %v531
    %v795 = vunpack.c.l.b16 %v532
    %v796 = vunpack.c.l.b16 %v533
    %v797 = vunpack.c.l.b16 %v534
    %v798 = vunpack.c.l.b16 %v535
    %v799 = vunpack.c.l.b16 %v536
    %v800 = vunpack.c.l.b16 %v537
    %v801 = vunpack.c.l.b16 %v538
    %v802 = vunpack.c.l.b16 %v539
    %v803 = vunpack.c.l.b16 %v540
    %v804 = vunpack.c.l.b16 %v541
    %v805 = vunpack.c.l.b16 %v542
    %v806 = vunpack.c.l.b16 %v543
    %v807 = vunpack.c.l.b16 %v544
    %v808 = vunpack.c.l.b16 %v545
    %v809 = vunpack.c.l.b16 %v546
    %v810 = vunpack.c.l.b16 %v547
    %v811 = vunpack.c.l.b16 %v548
    %v812 = vunpack.c.l.b16 %v549
    %v813 = vunpack.c.l.b16 %v550
    %v814 = vunpack.c.l.b16 %v551
    %v815 = vunpack.c.l.b16 %v552
    %v816 = vunpack.c.l.b16 %v553
    %v817 = vunpack.c.l.b16 %v554
    %v818 = vunpack.c.l.b16 %v555
    %v819 = vunpack.c.l.b16 %v556
    %v820 = vunpack.c.l.b16 %v557
    %v821 = vunpack.c.l.b16 %v558
    %v822 = vunpack.c.l.b16 %v559
    %v823 = vunpack.c.l.b16 %v560
    %v824 = vunpack.c.l.b16 %v561
    %v825 = vunpack.c.l.b16 %v562
    %v826 = vunpack.c.l.b16 %v563
    %v827 = vunpack.c.l.b16 %v564
    %v828 = vunpack.c.l.b16 %v565
    %v829 = vunpack.c.l.b16 %v566
    %v830 = vunpack.c.l.b16 %v567
    %v831 = vunpack.c.l.b16 %v568
    %v832 = vunpack.c.l.b16 %v569
    %v833 = vunpack.c.l.b16 %v570
    %v834 = vunpack.c.l.b16 %v571
    %v835 = vunpack.c.l.b16 %v572
    %v836 = vunpack.c.l.b16 %v573
    %v837 = vunpack.c.l.b16 %v574
    %v838 = vunpack.c.l.b16 %v575
    %v839 = vunpack.c.l.b16 %v576
    %v840 = vunpack.c.l.b16 %v577
    %v841 = vunpack.c.l.b16 %v578
    %v842 = vunpack.c.l.b16 %v579
    %v843 = vunpack.c.l.b16 %v580
    %v844 = vunpack.c.l.b16 %v581
    %v845 = vunpack.c.l.b16 %v582
    %v846 = vunpack.c.l.b16 %v583
    %v847 = vunpack.c.l.b16 %v584
    %v848 = vunpack.c.l.b16 %v585
    %v849 = vunpack.c.l.b16 %v586
    %v850 = vunpack.c.l.b16 %v587
    %v851 = vunpack.c.l.b16 %v588
    %v852 = vunpack.c.l.b16 %v589
    %v853 = vunpack.c.l.b16 %v590
    %v854 = vunpack.c.l.b16 %v591
    %v855 = vunpack.c.l.b16 %v592
    %v856 = vunpack.c.l.b16 %v593
    %v857 = vunpack.c.l.b16 %v594
    %v858 = vunpack.c.l.b16 %v595
    %v859 = vunpack.c.l.b16 %v596
    %v860 = vunpack.c.l.b16 %v597
    %v861 = vunpack.c.l.b16 %v598
    %v862 = vunpack.c.l.b16 %v599
    %v863 = vunpack.c.l.b16 %v600
    %v864 = vunpack.c.l.b16 %v601
    %v865 = vunpack.c.l.b16 %v602
    %v866 = vunpack.c.l.b16 %v603
    %v867 = vunpack.c.l.b16 %v604
    %v868 = vunpack.c.l.b16 %v605
    %v869 = vunpack.c.l.b16 %v606
    %v870 = vunpack.c.l.b16 %v607
    %v871 = vunpack.c.l.b16 %v608
    %v872 = vunpack.c.l.b16 %v609
    %v873 = vunpack.c.l.b16 %v610
    %v874 = vunpack.c.l.b16 %v611
    %v875 = vunpack.c.l.b16 %v612
    %v876 = vunpack.c.l.b16 %v613
    %v877 = vunpack.c.l.b16 %v614
    %v878 = vunpack.c.l.b16 %v615
    %v879 = vunpack.c.l.b16 %v616
    %v880 = vunpack.c.l.b16 %v617
    %v881 = vunpack.c.l.b16 %v618
    %v882 = vunpack.c.l.b16 %v619
    %v883 = vunpack.c.l.b16 %v620
    %v884 = vunpack.c.l.b16 %v621
    %v885 = vunpack.c.l.b16 %v622
    %v886 = vunpack.c.l.b16 %v623
    %v887 = vunpack.c.l.b16 %v624
    %v888 = vunpack.c.l.b16 %v625
    %v889 = vunpack.c.l.b16 %v626
    %v890 = vunpack.c.l.b16 %v627
    %v891 = vunpack.c.l.b16 %v628
    %v892 = vunpack.c.l.b16 %v629
    %v893 = vunpack.c.l.b16 %v630
    %v894 = vunpack.c.l.b16 %v631
    %v895 = vunpack.c.l.b16 %v632
    %v896 = vunpack.c.l.b16 %v633
    %v897 = vunpack.c.l.b16 %v634
    %v898 = vunpack.c.l.b16 %v635
    %v899 = vunpack.c.l.b16 %v636
    %v900 = vunpack.c.l.b16 %v637
    %v901 = vunpack.c.l.b16 %v638
    %v902 = vunpack.c.l.b16 %v639
    %v903 = vunpack.c.l.b16 %v640
    %v904 = vunpack.c.l.b16 %v641
    %v905 = vunpack.c.l.b16 %v642
    %v906 = vunpack.c.l.b16 %v643
    %v907 = vpack.c.b16 %v780, %v779
    %v908 = vpack.c.b16 %v782, %v781
    %v909 = vpack.c.b16 %v784, %v783
    %v910 = vpack.c.b16 %v786, %v785
    %v911 = vpack.c.b16 %v788, %v787
    %v912 = vpack.c.b16 %v790, %v789
    %v913 = vpack.c.b16 %v792, %v791
    %v914 = vpack.c.b16 %v794, %v793
    %v915 = vpack.c.b16 %v796, %v795
    %v916 = vpack.c.b16 %v798, %v797
    %v917 = vpack.c.b16 %v800, %v799
    %v918 = vpack.c.b16 %v802, %v801
    %v919 = vpack.c.b16 %v804, %v803
    %v920 = vpack.c.b16 %v806, %v805
    %v921 = vpack.c.b16 %v808, %v807
    %v922 = vpack.c.b16 %v810, %v809
    %v923 = vpack.c.b16 %v812, %v811
    %v924 = vpack.c.b16 %v814, %v813
    %v925 = vpack.c.b16 %v816, %v815
    %v926 = vpack.c.b16 %v818, %v817
    %v927 = vpack.c.b16 %v820, %v819
    %v928 = vpack.c.b16 %v822, %v821
    %v929 = vpack.c.b16 %v824, %v823
    %v930 = vpack.c.b16 %v826, %v825
    %v931 = vpack.c.b16 %v828, %v827
    %v932 = vpack.c.b16 %v830, %v829
    %v933 = vpack.c.b16 %v832, %v831
    %v934 = vpack.c.b16 %v834, %v833
    %v935 = vpack.c.b16 %v836, %v835
    %v936 = vpack.c.b16 %v838, %v837
    %v937 = vpack.c.b16 %v840, %v839
    %v938 = vpack.c.b16 %v842, %v841
    %v939 = vpack.c.b16 %v844, %v843
    %v940 = vpack.c.b16 %v846, %v845
    %v941 = vpack.c.b16 %v848, %v847
    %v942 = vpack.c.b16 %v850, %v849
    %v943 = vpack.c.b16 %v852, %v851
    %v944 = vpack.c.b16 %v854, %v853
    %v945 = vpack.c.b16 %v856, %v855
    %v946 = vpack.c.b16 %v858, %v857
    %v947 = vpack.c.b16 %v860, %v859
    %v948 = vpack.c.b16 %v862, %v861
    %v949 = vpack.c.b16 %v864, %v863
    %v950 = vpack.c.b16 %v866, %v865
    %v951 = vpack.c.b16 %v868, %v867
    %v952 = vpack.c.b16 %v870, %v869
    %v953 = vpack.c.b16 %v872, %v871
    %v954 = vpack.c.b16 %v874, %v873
    %v955 = vpack.c.b16 %v876, %v875
    %v956 = vpack.c.b16 %v878, %v877
    %v957 = vpack.c.b16 %v880, %v879
    %v958 = vpack.c.b16 %v882, %v881
    %v959 = vpack.c.b16 %v884, %v883
    %v960 = vpack.c.b16 %v886, %v885
    %v961 = vpack.c.b16 %v888, %v887
    %v962 = vpack.c.b16 %v890, %v889
    %v963 = vpack.c.b16 %v892, %v891
    %v964 = vpack.c.b16 %v894, %v893
    %v965 = vpack.c.b16 %v896, %v895
    %v966 = vpack.c.b16 %v898, %v897
    %v967 = vpack.c.b16 %v900, %v899
    %v968 = vpack.c.b16 %v902, %v901
    %v969 = vpack.c.b16 %v904, %v903
    %v970 = vpack.c.b16 %v906, %v905
    %1035 = vmatprep.subr.bf16.mxu0 0
    %1036 = vmatpush1.bf16.msra.mxu0 %v907
    %1037 = vmatprep.subr.bf16.mxu0 0
    %1038 = vmatpush1.bf16.msra.mxu0 %v908
    %1039 = vmatprep.subr.bf16.mxu0 0
    %1040 = vmatpush1.bf16.msra.mxu0 %v909
    %1041 = vmatprep.subr.bf16.mxu0 0
    %1042 = vmatpush1.bf16.msra.mxu0 %v910
    %1043 = vmatprep.subr.bf16.mxu0 0
    %1044 = vmatpush1.bf16.msra.mxu0 %v911
    %1045 = vmatprep.subr.bf16.mxu0 0
    %1046 = vmatpush1.bf16.msra.mxu0 %v912
    %1047 = vmatprep.subr.bf16.mxu0 0
    %1048 = vmatpush1.bf16.msra.mxu0 %v913
    %1049 = vmatprep.subr.bf16.mxu0 0
    %1050 = vmatpush1.bf16.msra.mxu0 %v914
    %1051 = vmatprep.subr.bf16.mxu0 0
    %1052 = vmatpush1.bf16.msra.mxu0 %v915
    %1053 = vmatprep.subr.bf16.mxu0 0
    %1054 = vmatpush1.bf16.msra.mxu0 %v916
    %1055 = vmatprep.subr.bf16.mxu0 0
    %1056 = vmatpush1.bf16.msra.mxu0 %v917
    %1057 = vmatprep.subr.bf16.mxu0 0
    %1058 = vmatpush1.bf16.msra.mxu0 %v918
    %1059 = vmatprep.subr.bf16.mxu0 0
    %1060 = vmatpush1.bf16.msra.mxu0 %v919
    %1061 = vmatprep.subr.bf16.mxu0 0
    %1062 = vmatpush1.bf16.msra.mxu0 %v920
    %1063 = vmatprep.subr.bf16.mxu0 0
    %1064 = vmatpush1.bf16.msra.mxu0 %v921
    %1065 = vmatprep.subr.bf16.mxu0 0
    %1066 = vmatpush1.bf16.msra.mxu0 %v922
    %1067 = vmatprep.mubr.bf16.mxu0 %v509
    %1068 = vmatmul.mubr.bf16.gmra.mrb[0].mxu0 %v508
    %v1069 = vpop.f32.mrb[0].mxu0
    %v1070 = vadd.f32 %v649, %v1069
    %v1071 = vpop.f32.mrb[0].mxu0
    %v1072 = vpop.f32.mrb[0].mxu0
    %v1073 = vadd.f32 %v649, %v1072
    %v1074 = vpop.f32.mrb[0].mxu0
    %1075 = vdwg.mxu0
    %1076 = vmatprep.subr.bf16.mxu0 0
    %1077 = vmatpush1.bf16.msra.mxu0 %v923
    %1078 = vmatprep.subr.bf16.mxu0 0
    %1079 = vmatpush1.bf16.msra.mxu0 %v924
    %1080 = vmatprep.subr.bf16.mxu0 0
    %1081 = vmatpush1.bf16.msra.mxu0 %v925
    %1082 = vmatprep.subr.bf16.mxu0 0
    %1083 = vmatpush1.bf16.msra.mxu0 %v926
    %1084 = vmatprep.subr.bf16.mxu0 0
    %1085 = vmatpush1.bf16.msra.mxu0 %v927
    %1086 = vmatprep.subr.bf16.mxu0 0
    %1087 = vmatpush1.bf16.msra.mxu0 %v928
    %1088 = vmatprep.subr.bf16.mxu0 0
    %1089 = vmatpush1.bf16.msra.mxu0 %v929
    %1090 = vmatprep.subr.bf16.mxu0 0
    %1091 = vmatpush1.bf16.msra.mxu0 %v930
    %1092 = vmatprep.subr.bf16.mxu0 0
    %1093 = vmatpush1.bf16.msra.mxu0 %v931
    %1094 = vmatprep.subr.bf16.mxu0 0
    %1095 = vmatpush1.bf16.msra.mxu0 %v932
    %1096 = vmatprep.subr.bf16.mxu0 0
    %1097 = vmatpush1.bf16.msra.mxu0 %v933
    %1098 = vmatprep.subr.bf16.mxu0 0
    %1099 = vmatpush1.bf16.msra.mxu0 %v934
    %1100 = vmatprep.subr.bf16.mxu0 0
    %1101 = vmatpush1.bf16.msra.mxu0 %v935
    %1102 = vmatprep.subr.bf16.mxu0 0
    %1103 = vmatpush1.bf16.msra.mxu0 %v936
    %1104 = vmatprep.subr.bf16.mxu0 0
    %1105 = vmatpush1.bf16.msra.mxu0 %v937
    %1106 = vmatprep.subr.bf16.mxu0 0
    %1107 = vmatpush1.bf16.msra.mxu0 %v938
    %1108 = vmatprep.mubr.bf16.mxu0 %v511
    %1109 = vmatmul.mubr.bf16.gmra.mrb[0].mxu0 %v510
    %v1110 = vpop.f32.mrb[0].mxu0
    %v1111 = vadd.f32 %v1070, %v1110
    %v1112 = vpop.f32.mrb[0].mxu0
    %v1113 = vpop.f32.mrb[0].mxu0
    %v1114 = vadd.f32 %v1073, %v1113
    %v1115 = vpop.f32.mrb[0].mxu0
    %1116 = vdwg.mxu0
    %1117 = vmatprep.subr.bf16.mxu0 0
    %1118 = vmatpush1.bf16.msra.mxu0 %v939
    %1119 = vmatprep.subr.bf16.mxu0 0
    %1120 = vmatpush1.bf16.msra.mxu0 %v940
    %1121 = vmatprep.subr.bf16.mxu0 0
    %1122 = vmatpush1.bf16.msra.mxu0 %v941
    %1123 = vmatprep.subr.bf16.mxu0 0
    %1124 = vmatpush1.bf16.msra.mxu0 %v942
    %1125 = vmatprep.subr.bf16.mxu0 0
    %1126 = vmatpush1.bf16.msra.mxu0 %v943
    %1127 = vmatprep.subr.bf16.mxu0 0
    %1128 = vmatpush1.bf16.msra.mxu0 %v944
    %1129 = vmatprep.subr.bf16.mxu0 0
    %1130 = vmatpush1.bf16.msra.mxu0 %v945
    %1131 = vmatprep.subr.bf16.mxu0 0
    %1132 = vmatpush1.bf16.msra.mxu0 %v946
    %1133 = vmatprep.subr.bf16.mxu0 0
    %1134 = vmatpush1.bf16.msra.mxu0 %v947
    %1135 = vmatprep.subr.bf16.mxu0 0
    %1136 = vmatpush1.bf16.msra.mxu0 %v948
    %1137 = vmatprep.subr.bf16.mxu0 0
    %1138 = vmatpush1.bf16.msra.mxu0 %v949
    %1139 = vmatprep.subr.bf16.mxu0 0
    %1140 = vmatpush1.bf16.msra.mxu0 %v950
    %1141 = vmatprep.subr.bf16.mxu0 0
    %1142 = vmatpush1.bf16.msra.mxu0 %v951
    %1143 = vmatprep.subr.bf16.mxu0 0
    %1144 = vmatpush1.bf16.msra.mxu0 %v952
    %1145 = vmatprep.subr.bf16.mxu0 0
    %1146 = vmatpush1.bf16.msra.mxu0 %v953
    %1147 = vmatprep.subr.bf16.mxu0 0
    %1148 = vmatpush1.bf16.msra.mxu0 %v954
    %1149 = vmatprep.mubr.bf16.mxu0 %v513
    %1150 = vmatmul.mubr.bf16.gmra.mrb[0].mxu0 %v512
    %v1151 = vpop.f32.mrb[0].mxu0
    %v1152 = vadd.f32 %v1111, %v1151
    %v1153 = vpop.f32.mrb[0].mxu0
    %v1154 = vpop.f32.mrb[0].mxu0
    %v1155 = vadd.f32 %v1114, %v1154
    %v1156 = vpop.f32.mrb[0].mxu0
    %1157 = vdwg.mxu0
    %1158 = vmatprep.subr.bf16.mxu0 0
    %1159 = vmatpush1.bf16.msra.mxu0 %v955
    %1160 = vmatprep.subr.bf16.mxu0 0
    %1161 = vmatpush1.bf16.msra.mxu0 %v956
    %1162 = vmatprep.subr.bf16.mxu0 0
    %1163 = vmatpush1.bf16.msra.mxu0 %v957
    %1164 = vmatprep.subr.bf16.mxu0 0
    %1165 = vmatpush1.bf16.msra.mxu0 %v958
    %1166 = vmatprep.subr.bf16.mxu0 0
    %1167 = vmatpush1.bf16.msra.mxu0 %v959
    %1168 = vmatprep.subr.bf16.mxu0 0
    %1169 = vmatpush1.bf16.msra.mxu0 %v960
    %1170 = vmatprep.subr.bf16.mxu0 0
    %1171 = vmatpush1.bf16.msra.mxu0 %v961
    %1172 = vmatprep.subr.bf16.mxu0 0
    %1173 = vmatpush1.bf16.msra.mxu0 %v962
    %1174 = vmatprep.subr.bf16.mxu0 0
    %1175 = vmatpush1.bf16.msra.mxu0 %v963
    %1176 = vmatprep.subr.bf16.mxu0 0
    %1177 = vmatpush1.bf16.msra.mxu0 %v964
    %1178 = vmatprep.subr.bf16.mxu0 0
    %1179 = vmatpush1.bf16.msra.mxu0 %v965
    %1180 = vmatprep.subr.bf16.mxu0 0
    %1181 = vmatpush1.bf16.msra.mxu0 %v966
    %1182 = vmatprep.subr.bf16.mxu0 0
    %1183 = vmatpush1.bf16.msra.mxu0 %v967
    %1184 = vmatprep.subr.bf16.mxu0 0
    %1185 = vmatpush1.bf16.msra.mxu0 %v968
    %1186 = vmatprep.subr.bf16.mxu0 0
    %1187 = vmatpush1.bf16.msra.mxu0 %v969
    %1188 = vmatprep.subr.bf16.mxu0 0
    %1189 = vmatpush1.bf16.msra.mxu0 %v970
    %1190 = vmatprep.mubr.bf16.mxu0 %v515
    %1191 = vmatmul.mubr.bf16.gmra.mrb[0].mxu0 %v514
    %v1192 = vpop.f32.mrb[0].mxu0
    %v1193 = vadd.f32 %v1152, %v1192
    %v1194 = vpop.f32.mrb[0].mxu0
    %v1195 = vpop.f32.mrb[0].mxu0
    %v1196 = vadd.f32 %v1155, %v1195
    %v1197 = vpop.f32.mrb[0].mxu0
    %1198 = vdwg.mxu0
    %1199 = vst [vmem:[%s5] sm:$0xff] %v1193
    %1200 = vst [vmem:[%s5 + $0x8] sm:$0xff] %v1196
    // Predicated region
    $region38: #{_pose_regressor_impl.1} parent=1 // pred_check
      _
    $region39: #{_pose_regressor_impl.1} parent=1 // pred_check_branch
      %1202 = sbr.rel (0) target = $region41
    $region40: #{_pose_regressor_impl.1} parent=1 // pred_region
      _
    $region41: #{_pose_regressor_impl.1} parent=1 // pred_fallthru
      _
    // Predicated region
    $region42: #{_pose_regressor_impl.1} parent=1 // pred_check
      _
    $region43: #{_pose_regressor_impl.1} parent=1 // pred_check_branch
      %1204 = sbr.rel (0) target = $region45
    $region44: #{_pose_regressor_impl.1} parent=1 // pred_region
      _
    $region45: #{_pose_regressor_impl.1} parent=1 // pred_fallthru
      _
    %1205 = vsyncpa [#allocation3], 1
    %1206 = vsyncpa [#allocation5], 1
    %1207 = vsyncpa [#allocation8], 1

</llo_original>
